<compile_context>
chip_gen: v6e
topology: v6e:2x2x1
jax: 0.10.0
libtpu: 0.0.40
codegen_flags: <defaults>
</compile_context>

<pallas_src>
import functools

import jax
import jax.numpy as jnp
from jax.experimental import pallas as pl
from jax.experimental.pallas import tpu as pltpu


def _round_up(v, m):
    return ((v + m - 1) // m) * m


@functools.lru_cache(maxsize=1)
def _vmem_capacity_bytes():
    """Trace-time query of VMEM capacity; conservative fallback if unavailable."""
    try:
        return int(pltpu.get_tpu_info().vmem_capacity_bytes)
    except Exception:
        return 64 * 1024 * 1024  # v7x per-TC capacity: safe everywhere


def _fit_tile(tm, k_pad, n_pad, x_bytes, w_bytes, out_bytes, budget):
    """Shrink the M tile until the double-buffered VMEM footprint fits budget.

    Uses lane/sublane padded extents so the estimate matches real VMEM tiles.
    Result is a multiple of 16 (bf16 (16,128) packing; also satisfies f32 8).
    """
    def footprint(t):
        return (2 * t * k_pad * x_bytes            # x tile, double buffered
                + 2 * t * n_pad * out_bytes        # out tile, double buffered
                + 2 * k_pad * n_pad * w_bytes      # resident weight (2 bufs)
                + 2 * n_pad * 4)                   # bias
    while tm > 16 and footprint(tm) > budget:
        tm //= 2
    return max(16, (tm // 16) * 16)


def _linear_kernel(x_ref, w_ref, b_ref, o_ref, *, compute_dtype):
    # x_ref: (tm, K) native dtype, w_ref: (K, N) native dtype,
    # b_ref: (1, N) f32, o_ref: (tm, N).
    # Cast on the VPU (free: kernel is HBM-bound), single MXU dot with f32
    # accumulation, f32 bias add, cast to the output dtype.
    x = x_ref[...]
    w = w_ref[...]
    if compute_dtype is not None:
        x = x.astype(compute_dtype)
        w = w.astype(compute_dtype)
    acc = jnp.dot(x, w, preferred_element_type=jnp.float32)
    o_ref[...] = (acc + b_ref[...]).astype(o_ref.dtype)


@functools.partial(jax.jit, static_argnames=("tm", "compute_dtype"))
def ner_head_forward(x, weight_t, bias, *, tm=4096, compute_dtype=jnp.bfloat16):
    """Pallas implementation of NERHead.forward (the output Linear layer).

    Args:
      x:        (batch, T, input_dim) -- any float dtype (f32 or bf16).
      weight_t: (input_dim, n_labels) -- PyTorch weight transposed ONCE at
                parameter-load time (outside the hot path).
      bias:     (n_labels,) float32
      compute_dtype: MXU input dtype (bf16 default; None => native/f32 path).
    Returns:
      (batch, T, n_labels) in x.dtype
    """
    batch, T, K = x.shape
    Kw, n_labels = weight_t.shape
    assert Kw == K
    M = batch * T

    x_bytes = x.dtype.itemsize
    w_bytes = weight_t.dtype.itemsize
    out_bytes = x.dtype.itemsize

    # Lane-padded extents for the VMEM footprint estimate.
    k_pad = _round_up(K, 128)
    n_pad = _round_up(n_labels, 128)

    capacity = _vmem_capacity_bytes()
    budget = min(capacity // 2, 64 * 1024 * 1024)          # tile footprint target
    vmem_limit = min((capacity * 3) // 4, 96 * 1024 * 1024)  # compiler limit

    # M tile: multiple of 16, no bigger than needed, fits VMEM, and at least
    # 2 grid steps whenever M allows (v7x megacore sharding on the parallel axis).
    tm_eff = max(16, (min(max(tm, 16), _round_up(M, 16)) // 16) * 16)
    tm_eff = _fit_tile(tm_eff, k_pad, n_pad, x_bytes, w_bytes, out_bytes, budget)
    tm_eff = min(tm_eff, max(16, _round_up(pl.cdiv(M, 2), 16)))

    grid = (pl.cdiv(M, tm_eff),)

    x2d = x.reshape(M, K)                       # metadata-only under jit
    b2d = bias.reshape(1, n_labels).astype(jnp.float32)

    kernel = functools.partial(_linear_kernel, compute_dtype=compute_dtype)

    cost = pl.CostEstimate(
        flops=2 * M * K * n_labels,
        transcendentals=0,
        bytes_accessed=(M * K * x_bytes + K * n_labels * w_bytes
                        + n_labels * 4 + M * n_labels * out_bytes),
    )

    out2d = pl.pallas_call(
        kernel,
        out_shape=jax.ShapeDtypeStruct((M, n_labels), x.dtype),
        grid_spec=pltpu.PrefetchScalarGridSpec(
            num_scalar_prefetch=0,
            grid=grid,
            in_specs=[
                pl.BlockSpec((tm_eff, K), lambda i: (i, 0)),      # x tile (streams)
                pl.BlockSpec((K, n_labels), lambda i: (0, 0)),    # resident weight
                pl.BlockSpec((1, n_labels), lambda i: (0, 0)),    # bias
            ],
            out_specs=pl.BlockSpec((tm_eff, n_labels), lambda i: (i, 0)),
        ),
        compiler_params=pltpu.CompilerParams(
            dimension_semantics=("parallel",),
            vmem_limit_bytes=int(vmem_limit),
        ),
        cost_estimate=cost,
    )(x2d, weight_t, b2d)

    return out2d.reshape(batch, T, n_labels)


if __name__ == "__main__":
    key = jax.random.PRNGKey(0)

    def run_case(batch, T, input_dim, n_labels, case_key):
        kx, kw, kb = jax.random.split(case_key, 3)
        x = jax.random.normal(kx, (batch, T, input_dim), dtype=jnp.float32)
        # Deterministic parameter init (mimicking PyTorch Linear's uniform range).
        bound = 1.0 / (input_dim ** 0.5)
        weight = jax.random.uniform(kw, (n_labels, input_dim), jnp.float32,
                                    -bound, bound)
        bias = jax.random.uniform(kb, (n_labels,), jnp.float32, -bound, bound)
        # `trans` parameter of NERHead is unused in forward() (only in CRF
        # decode/loss); kept conceptually for parity with the module.
        # TODO(synk): decode()/loss() use a LinearChainCRF (DP forward/Viterbi);
        # not part of forward(), so not implemented here.

        # Transpose once, outside the hot path (store W pre-transposed).
        weight_t = weight.T  # (K, n_labels)

        out = ner_head_forward(x, weight_t, bias)
        jax.block_until_ready(out)
        assert out.shape == (batch, T, n_labels)

        # Reference at matching precision (bf16 inputs, f32 accumulate).
        ref_bf16 = (jnp.dot(x.reshape(-1, input_dim).astype(jnp.bfloat16),
                            weight_t.astype(jnp.bfloat16),
                            preferred_element_type=jnp.float32)
                    + bias).reshape(batch, T, n_labels)
        assert jnp.allclose(out, ref_bf16, atol=1e-3, rtol=1e-3), (
            float(jnp.abs(out - ref_bf16).max()))

        # Loose sanity check against the full-f32 PyTorch-semantics reference.
        ref_f32 = x @ weight.T + bias
        assert jnp.allclose(out, ref_f32, atol=5e-2, rtol=5e-2), (
            float(jnp.abs(out - ref_f32).max()))

    k1, k2 = jax.random.split(key)
    # Toy shape (single exact block): batch=2, T=8, K=32, n_labels=16.
    run_case(2, 8, 32, 16, k1)
    # Shape exercising the masked-tail path (batch*T=51 -> 2 grid steps of 32)
    # and an unpadded small label dim (n_labels=20) with K=256.
    run_case(3, 17, 256, 20, k2)

    print("KERNEL_OK")
</pallas_src>

<mosaic_0001>
module attributes {stable_mosaic.version = 11 : i64} {
  func.func @_linear_kernel(%arg0: i32, %arg1: memref<16x32xf32, #tpu.memory_space<vmem>>, %arg2: memref<32x16xf32, #tpu.memory_space<vmem>>, %arg3: memref<1x16xf32, #tpu.memory_space<vmem>>, %arg4: memref<16x16xf32, #tpu.memory_space<vmem>>) attributes {dimension_semantics = [#tpu.dimension_semantics<parallel>], iteration_bounds = array<i64: 1>, scalar_prefetch = 0 : i64, scratch_operands = 0 : i64, tpu.core_type = #tpu.core_type<tc>, window_params = [{transform_indices = @transform_0, window_bounds = array<i64: 16, 32>}, {pipeline_mode = #tpu.pipeline_mode<synchronous>, transform_indices = @transform_1, window_bounds = array<i64: 32, 16>}, {pipeline_mode = #tpu.pipeline_mode<synchronous>, transform_indices = @transform_2, window_bounds = array<i64: 1, 16>}, {transform_indices = @transform_3, window_bounds = array<i64: 16, 16>}]} {
    %c0 = arith.constant 0 : index
    %c0_0 = arith.constant 0 : index
    %0 = vector.load %arg1[%c0, %c0_0] : memref<16x32xf32, #tpu.memory_space<vmem>>, vector<16x32xf32>
    %c0_1 = arith.constant 0 : index
    %c0_2 = arith.constant 0 : index
    %1 = vector.load %arg2[%c0_1, %c0_2] : memref<32x16xf32, #tpu.memory_space<vmem>>, vector<32x16xf32>
    %2 = arith.truncf %0 : vector<16x32xf32> to vector<16x32xbf16>
    %3 = arith.truncf %1 : vector<32x16xf32> to vector<32x16xbf16>
    %cst = arith.constant dense<0.000000e+00> : vector<16x16xf32>
    %4 = tpu.matmul %2, %3, %cst {dimension_numbers = #tpu.dot_dimension_numbers<[1], [0], [0], [1], [0, 0, 1, 1], [], []>} : vector<16x32xbf16>, vector<32x16xbf16>, vector<16x16xf32> -> vector<16x16xf32>
    %c0_3 = arith.constant 0 : index
    %c0_4 = arith.constant 0 : index
    %5 = vector.load %arg3[%c0_3, %c0_4] : memref<1x16xf32, #tpu.memory_space<vmem>>, vector<1x16xf32>
    %6 = vector.broadcast %5 : vector<1x16xf32> to vector<16x16xf32>
    %7 = arith.addf %4, %6 : vector<16x16xf32>
    %c0_5 = arith.constant 0 : index
    %c0_6 = arith.constant 0 : index
    %8 = vector.load %arg4[%c0_5, %c0_6] : memref<16x16xf32, #tpu.memory_space<vmem>>, vector<16x16xf32>
    tpu.vector_store %arg4[%c0_5, %c0_6], %7 {strides = array<i32>} : memref<16x16xf32, #tpu.memory_space<vmem>>, vector<16x16xf32>,
    return
  }
  func.func @transform_0(%arg0: i32) -> (i32, i32) {
    %c0_i32 = arith.constant 0 : i32
    %c0_i32_0 = arith.constant 0 : i32
    return %arg0, %c0_i32 : i32, i32
  }
  func.func @transform_1(%arg0: i32) -> (i32, i32) {
    %c0_i32 = arith.constant 0 : i32
    %c0_i32_0 = arith.constant 0 : i32
    %c0_i32_1 = arith.constant 0 : i32
    return %c0_i32, %c0_i32_0 : i32, i32
  }
  func.func @transform_2(%arg0: i32) -> (i32, i32) {
    %c0_i32 = arith.constant 0 : i32
    %c0_i32_0 = arith.constant 0 : i32
    %c0_i32_1 = arith.constant 0 : i32
    return %c0_i32, %c0_i32_0 : i32, i32
  }
  func.func @transform_3(%arg0: i32) -> (i32, i32) {
    %c0_i32 = arith.constant 0 : i32
    %c0_i32_0 = arith.constant 0 : i32
    return %arg0, %c0_i32 : i32, i32
  }
}

</mosaic_0001>

<llo_original>
// kernel: ner_head_forward.1
$region0: #{ner_head_forward.1}
  #allocation0 [shape = 'u32[]', space=smem, size = 0x4, offset = 0x4, fixed_abs, tag = 'smem constant byte address 0x4 - core index']
  #allocation1 [shape = 'u32[144,128]{1,0:T(1,128)}', space=vmem, size = 0x12000, scoped, tag = 'internal scratch']
  %s0 = inlined_call_operand.vmem [shape: f32[16,32], index: 0, kind: input, shape index: {}]
  %s1 = inlined_call_operand.vmem [shape: f32[32,16], index: 1, kind: input, shape index: {}]
  %s2 = inlined_call_operand.vmem [shape: f32[1,16], index: 2, kind: input, shape index: {}]
  %s3 = inlined_call_operand.hbm [shape: f32[16,16], index: 3, kind: output, shape index: {}]
  %s4 = sld [smem:[#allocation0]]
  $region22: #{ner_head_forward.1} parent=0
    _
  %s6 = ssub.s32 1, %s4
  %s7 = scalar_select 0, %s6, %s4
  $region1: #{ner_head_forward.1} parent=0
    #allocation2 [shape = 'u8[8192]{0}', space=vmem, size = 0x2000, scoped, tag = 'output window, operand 0, single buffered']
    #allocation3 [shape = 's32[1]{0}', space=sflag, size = 0x4, scoped, tag = 'scoped memory for ner_head_forward.1']
    %8 = vsyncpa [#allocation3], 0
    // Predicated region
    $region2: #{ner_head_forward.1} parent=1 // pred_check
      _
    $region3: #{ner_head_forward.1} parent=1 // pred_check_branch
      %10 = sbr.rel (0) target = $region5
    $region4: #{ner_head_forward.1} parent=1 // pred_region
      _
    $region5: #{ner_head_forward.1} parent=1 // pred_fallthru
      _
    // Predicated region
    $region6: #{ner_head_forward.1} parent=1 // pred_check
      _
    $region7: #{ner_head_forward.1} parent=1 // pred_check_branch
      %12 = sbr.rel (0) target = $region9
    $region8: #{ner_head_forward.1} parent=1 // pred_region
      _
    $region9: #{ner_head_forward.1} parent=1 // pred_fallthru
      _
    // Predicated region
    $region10: #{ner_head_forward.1} parent=1 // pred_check
      _
    $region11: #{ner_head_forward.1} parent=1 // pred_check_branch
      %14 = sbr.rel (0) target = $region13
    $region12: #{ner_head_forward.1} parent=1 // pred_region
      _
    $region13: #{ner_head_forward.1} parent=1 // pred_fallthru
      _
    %v16 = vld [vmem:[%s0] sm:$0xff]
    %v17 = vld [vmem:[%s0 + $0x8] sm:$0xff]
    %v18 = vld [vmem:[%s1] sm:$0xff]
    %v19 = vld [vmem:[%s1 + $0x8] sm:$0xff]
    %v20 = vld [vmem:[%s1 + $0x10] sm:$0xff]
    %v21 = vld [vmem:[%s1 + $0x18] sm:$0xff]
    %v22 = vpack.c.bf16 %v17, %v16
    %v23 = vpack.c.bf16 %v19, %v18
    %v24 = vpack.c.bf16 %v21, %v20
    %v25 = vld [vmem:[%s2] sm:$0x1]
    %v27 = vlaneseq
    %v28 = vshrl.u32 %v27, 7
    %v29 = vsub.s32 0, %v28
    %v30 = vrot.slane %v25, %v29
    %vm32 = vcmask 261120
    %v34 = vsel %vm32, %v22, 0
    %36 = vmatprep.subr.bf16.mxu0 0
    %37 = vmatpush1.bf16.msra.mxu0 0
    %38 = vmatprep.subr.bf16.mxu0 0
    %39 = vmatpush1.bf16.msra.mxu0 0
    %40 = vmatprep.subr.bf16.mxu0 0
    %41 = vmatpush1.bf16.msra.mxu0 0
    %42 = vmatprep.subr.bf16.mxu0 0
    %43 = vmatpush1.bf16.msra.mxu0 0
    %44 = vmatprep.subr.bf16.mxu0 0
    %45 = vmatpush1.bf16.msra.mxu0 0
    %46 = vmatprep.subr.bf16.mxu0 0
    %47 = vmatpush1.bf16.msra.mxu0 0
    %48 = vmatprep.subr.bf16.mxu0 0
    %49 = vmatpush1.bf16.msra.mxu0 %v24
    %50 = vmatprep.subr.bf16.mxu0 0
    %51 = vmatpush1.bf16.msra.mxu0 %v23
    %52 = vmatprep.subr.bf16.mxu0 0
    %53 = vmatpush2.bf16.msra.mxu0 0
    %54 = vmatprep.subr.bf16.mxu0 0
    %55 = vmatpush2.bf16.msra.mxu0 0
    %56 = vmatprep.subr.bf16.mxu0 0
    %57 = vmatpush2.bf16.msra.mxu0 0
    %58 = vmatprep.subr.bf16.mxu0 0
    %59 = vmatpush2.bf16.msra.mxu0 0
    %60 = vmatprep.subr.bf16.mxu0 0
    %61 = vmatpush2.bf16.msra.mxu0 0
    %62 = vmatprep.subr.bf16.mxu0 0
    %63 = vmatpush2.bf16.msra.mxu0 0
    %64 = vmatprep.subr.bf16.mxu0 0
    %65 = vmatpush2.bf16.msra.mxu0 0
    %66 = vmatprep.subr.bf16.mxu0 0
    %67 = vmatpush2.bf16.msra.mxu0 0
    %68 = vmatprep.mubr.bf16.mxu0 0
    %69 = vmatmul.mubr.bf16.gmra.mxu0 %v34
    %v70 = vpop.f32.mrf.mxu0
    %v71 = vadd.f32 %v30, %v70
    %v72 = vpop.f32.mrf.mxu0
    %v73 = vpop.f32.mrf.mxu0
    %v74 = vadd.f32 %v30, %v73
    %v75 = vpop.f32.mrf.mxu0
    %76 = vdwg.mxu0
    %vm77 = vcmask 130048
    %78 = vst.msk [vmem:[#allocation2] sm:$0xff] %vm77, %v71
    %79 = vst.msk [vmem:[#allocation2 + $0x8] sm:$0xff] %vm77, %v74
    // Predicated region
    $region14: #{ner_head_forward.1} parent=1 // pred_check
      _
    $region15: #{ner_head_forward.1} parent=1 // pred_check_branch
      %81 = sbr.rel (0) target = $region17
    $region16: #{ner_head_forward.1} parent=1 // pred_region
      %s83 = ssub.s32 256, 256
      %84 = vsyncadd [#allocation3], %s83
      %s85 = sshll.u32 [#allocation2], 4
      %s86 = int_to_ptr.vmem [resolvable:$true] %s85
      %91 = dma.vmem_to_hbm [thread:$0]  %s86, 256, %s3, [#allocation3], 128, 128, 8
    $region17: #{ner_head_forward.1} parent=1 // pred_fallthru
      _
    // Predicated region
    $region18: #{ner_head_forward.1} parent=1 // pred_check
      _
    $region19: #{ner_head_forward.1} parent=1 // pred_check_branch
      %93 = sbr.rel (0) target = $region21
    $region20: #{ner_head_forward.1} parent=1 // pred_region
      %94 = dma.done [#allocation3], 256
    $region21: #{ner_head_forward.1} parent=1 // pred_fallthru
      _
    %95 = vsyncpa [#allocation3], 1

</llo_original>
